<compile_context>
chip_gen: v6e
topology: v6e:2x2x1
jax: 0.10.0
libtpu: 0.0.40
codegen_flags: <defaults>
</compile_context>

<pallas_src>
import functools
import math

import jax
import jax.numpy as jnp
from jax.experimental import pallas as pl
from jax.experimental.pallas import tpu as pltpu


_NEG_INF = -1e30
_VMEM_BUDGET = 40 * 1024 * 1024   # conservative: fits v7x (64 MiB phys) with headroom


def _pick_tile(dim, target, align):
    """Largest multiple of `align` that divides `dim` and is <= target, else full dim."""
    if dim <= target:
        return dim
    t = (target // align) * align
    while t >= align:
        if dim % t == 0:
            return t
        t -= align
    return dim


def _compiler_params(need_bytes, sems):
    # Raise the scoped-VMEM limit explicitly (v5e default is only 16 MiB); cap
    # below v7x's 64 MiB physical VMEM.
    limit = min(60 * 1024 * 1024, max(int(need_bytes) + (4 << 20), 32 * 1024 * 1024))
    return pltpu.CompilerParams(dimension_semantics=sems, vmem_limit_bytes=limit)


# ----------------------------- tiled linear (fused QKV / output proj) ------

def _linear_kernel(x_ref, w_ref, b_ref, o_ref):
    # x: (tm, K) bf16, w: (K, N) bf16 (VMEM resident per g), b: (1, N) f32.
    acc = jnp.dot(x_ref[...], w_ref[...], preferred_element_type=jnp.float32)
    o_ref[...] = (acc + b_ref[...]).astype(o_ref.dtype)


def fused_linear(x, w, b, *, out_dtype=jnp.float32, tm=512):
    """x: (Gx, M, K) with Gx in {1, G}; w: (G, K, N) bf16; b: (G, 1, N) f32 -> (G, M, N).

    Full-K / full-N blocks: the (K, N) weight slab is DMA'd once per g and
    stays VMEM-resident while all M tiles stream through (no K-axis
    accumulator, no per-step VMEM RMW).
    """
    Gx, M, K = x.shape
    G, K2, N = w.shape
    assert K2 == K and Gx in (1, G)
    assert w.dtype == jnp.bfloat16 and b.dtype == jnp.float32  # pre-cast at prepare time

    x = x.astype(jnp.bfloat16)                   # activation cast only (weights pre-cast)
    out_isz = jnp.dtype(out_dtype).itemsize

    tm = _pick_tile(M, tm, 8)

    def need(t):
        # double-buffered x / w / b / out windows
        return 2 * (t * K * 2 + K * N * 2 + N * 4 + t * N * out_isz)

    for _ in range(8):
        if need(tm) <= _VMEM_BUDGET or tm <= 8:
            break
        new_tm = _pick_tile(M, max(tm // 2, 8), 8)
        if new_tm >= tm:
            break
        tm = new_tm
    # TODO(synk): for very large d_model the resident (K, N) weight slab itself
    #             can exceed the budget; an N-tiled fallback would be needed then.

    grid = (G, M // tm)
    x_index = (lambda g, i: (0, i, 0)) if Gx == 1 else (lambda g, i: (g, i, 0))

    cost = pl.CostEstimate(
        flops=int(2 * G * M * K * N),
        transcendentals=0,
        bytes_accessed=int(G * (M * K * 2 + K * N * 2 + N * 4 + M * N * out_isz)),
    )

    return pl.pallas_call(
        _linear_kernel,
        out_shape=jax.ShapeDtypeStruct((G, M, N), out_dtype),
        grid_spec=pltpu.PrefetchScalarGridSpec(
            num_scalar_prefetch=0,
            grid=grid,
            in_specs=[
                pl.BlockSpec((None, tm, K), x_index),
                pl.BlockSpec((None, K, N), lambda g, i: (g, 0, 0)),
                pl.BlockSpec((None, 1, N), lambda g, i: (g, 0, 0)),
            ],
            out_specs=pl.BlockSpec((None, tm, N), lambda g, i: (g, i, 0)),
        ),
        # g sequential (weights resident per g), M tiles parallel across cores.
        compiler_params=_compiler_params(need(tm), ("arbitrary", "parallel")),
        cost_estimate=cost,
    )(x, w, b)


# ----------------------------- flash multi-head attention ------------------

def _flash_mha_kernel(q_ref, k_ref, v_ref, o_ref, m_ref, l_ref, acc_ref, *, h, d_k):
    # q: (tq, d_model) bf16, k/v: (tkv, d_model) bf16 (heads packed in lanes,
    # 1/sqrt(d_k) already folded into the Q projection weights).
    # m/l: (tq, h) f32, acc: (tq, d_model) f32.
    kv = pl.program_id(2)

    @pl.when(kv == 0)
    def _init():
        m_ref[...] = jnp.full(m_ref.shape, _NEG_INF, jnp.float32)
        l_ref[...] = jnp.zeros(l_ref.shape, jnp.float32)
        acc_ref[...] = jnp.zeros(acc_ref.shape, jnp.float32)

    q = q_ref[...]
    k = k_ref[...]
    v = v_ref[...]
    # Running stats: one lane-dense load per KV step (and one store at the end)
    # instead of h masked partial-lane RMWs in VMEM.
    m_prev_all = m_ref[...]
    l_prev_all = l_ref[...]
    acc_prev = acc_ref[...]

    dims = (((1,), (1,)), ((), ()))   # contract last dims => q @ k^T, no k.T copy
    m_new_c, l_new_c, acc_new_c = [], [], []
    for i in range(h):                # static unroll over packed heads
        sl = slice(i * d_k, (i + 1) * d_k)
        s = jax.lax.dot_general(q[:, sl], k[:, sl], dims,
                                preferred_element_type=jnp.float32)   # (tq, tkv) f32

        m_prev = m_prev_all[:, i:i + 1]
        m_new = jnp.maximum(m_prev, jnp.max(s, axis=-1, keepdims=True))
        alpha = jnp.exp(m_prev - m_new)
        p = jnp.exp(s - m_new)        # f32 exp (portable to v5e; bf16 exp is a
                                      # v6e/v7x-only micro-opt left out for safety)
        l_new_c.append(alpha * l_prev_all[:, i:i + 1] +
                       jnp.sum(p, axis=-1, keepdims=True))
        m_new_c.append(m_new)

        pv = jnp.dot(p.astype(v.dtype), v[:, sl],
                     preferred_element_type=jnp.float32)              # (tq, d_k) f32
        acc_new_c.append(alpha * acc_prev[:, sl] + pv)

    # Single whole-ref (lane-dense) stores per KV step.
    m_ref[...] = jnp.concatenate(m_new_c, axis=-1)
    l_ref[...] = jnp.concatenate(l_new_c, axis=-1)
    acc_ref[...] = jnp.concatenate(acc_new_c, axis=-1)

    @pl.when(kv == pl.num_programs(2) - 1)
    def _finalize():
        inv_l = pl.reciprocal(l_ref[...], approx=True)                # (tq, h), EUP
        acc = acc_ref[...]
        out = jnp.concatenate(
            [acc[:, i * d_k:(i + 1) * d_k] * inv_l[:, i:i + 1] for i in range(h)],
            axis=-1)
        o_ref[...] = out.astype(o_ref.dtype)                          # one lane-dense store


def flash_attention(qkv, h, *, tq=512, tkv=512):
    """qkv: (3, B, S, d_model), heads packed in last dim -> (B, S, d_model) bf16."""
    _, B, S, d_model = qkv.shape
    assert d_model % h == 0
    d_k = d_model // h

    tq = _pick_tile(S, tq, 16)
    tkv = _pick_tile(S, tkv, 16)

    def need(tq_, tkv_):
        return (2 * 2 * (tq_ * d_model * 2)           # q + out windows (double-buffered)
                + 2 * 2 * (tkv_ * d_model * 2)        # k + v windows (double-buffered)
                + 2 * tq_ * d_model * 4               # f32 acc + dense copy
                + 4 * tq_ * tkv_ * 4)                 # per-head score temporaries

    for _ in range(8):
        if need(tq, tkv) <= _VMEM_BUDGET:
            break
        if tkv >= tq and tkv > 128:
            nt = _pick_tile(S, tkv // 2, 16)
            if nt < tkv:
                tkv = nt
                continue
        if tq > 128:
            nt = _pick_tile(S, tq // 2, 16)
            if nt < tq:
                tq = nt
                continue
        break

    # Keep at least 2 parallel tiles so v7x's two TensorCores both get work.
    while B * (S // tq) < 2 and tq >= 256 and S % (tq // 2) == 0:
        tq //= 2

    grid = (B, S // tq, S // tkv)     # KV (reduction) axis last

    q_spec = pl.BlockSpec((None, None, tq, d_model), lambda b, qi, ki: (0, b, qi, 0))
    k_spec = pl.BlockSpec((None, None, tkv, d_model), lambda b, qi, ki: (1, b, ki, 0))
    v_spec = pl.BlockSpec((None, None, tkv, d_model), lambda b, qi, ki: (2, b, ki, 0))
    o_spec = pl.BlockSpec((None, tq, d_model), lambda b, qi, ki: (b, qi, 0))

    cost = pl.CostEstimate(
        flops=int(4 * B * S * S * d_model),
        transcendentals=int(B * h * S * S),
        bytes_accessed=int(B * S * d_model * 2 * (2 + 2 * (S // tq))),
    )

    kernel = functools.partial(_flash_mha_kernel, h=h, d_k=d_k)
    return pl.pallas_call(
        kernel,
        out_shape=jax.ShapeDtypeStruct((B, S, d_model), jnp.bfloat16),
        grid_spec=pltpu.PrefetchScalarGridSpec(
            num_scalar_prefetch=0,
            grid=grid,
            in_specs=[q_spec, k_spec, v_spec],
            out_specs=o_spec,
            scratch_shapes=[
                pltpu.VMEM((tq, h), jnp.float32),        # running max per head
                pltpu.VMEM((tq, h), jnp.float32),        # running denom per head
                pltpu.VMEM((tq, d_model), jnp.float32),  # output accumulator
            ],
        ),
        compiler_params=_compiler_params(
            need(tq, tkv), ("parallel", "parallel", "arbitrary")),
        cost_estimate=cost,
    )(qkv, qkv, qkv)


# ------------------------------ module wrapper ------------------------------

def init_mha_params(key, h, d_model):
    """4 x nn.Linear(d_model, d_model): deterministic uniform init like PyTorch."""
    params = []
    bound = 1.0 / math.sqrt(d_model)
    for i in range(4):
        kw, kb = jax.random.split(jax.random.fold_in(key, i))
        # stored pre-transposed: (Din, Dout) so forward is x @ W + b
        w = jax.random.uniform(kw, (d_model, d_model), jnp.float32, -bound, bound)
        b = jax.random.uniform(kb, (d_model,), jnp.float32, -bound, bound)
        params.append((w, b))
    return params


def prepare_mha_params(params, h):
    """One-time re-pack: stack QKV, fold 1/sqrt(d_k) into the Q projection, and
    pre-cast weights to bf16 / biases to f32 (no per-forward weight casts)."""
    (wq, bq), (wk, bk), (wv, bv), (wo, bo) = params
    d_model = wq.shape[0]
    scale = 1.0 / math.sqrt(d_model // h)
    wq = wq * scale                                  # fold softmax scale into Q proj
    bq = bq * scale
    w_qkv = jnp.stack([wq, wk, wv]).astype(jnp.bfloat16)         # (3, d, d) bf16
    b_qkv = jnp.stack([bq, bk, bv])[:, None, :].astype(jnp.float32)   # (3, 1, d) f32
    w_o = wo[None].astype(jnp.bfloat16)                          # (1, d, d) bf16
    b_o = bo[None, None, :].astype(jnp.float32)                  # (1, 1, d) f32
    return w_qkv, b_qkv, w_o, b_o


def multi_headed_attention(prepared, query, key, value, h):
    """query/key/value: (B, S, d_model) -> (B, S, d_model)."""
    w_qkv, b_qkv, w_o, b_o = prepared
    B, S, d_model = query.shape
    assert d_model % h == 0
    assert key.shape == value.shape == (B, S, d_model)  # TODO(synk): S_q != S_kv path

    if query is key and key is value:
        # self-attention fast path (single activation tensor feeds q/k/v proj)
        x = query.reshape(1, B * S, d_model)
    else:
        x = jnp.stack([query.reshape(B * S, d_model),
                       key.reshape(B * S, d_model),
                       value.reshape(B * S, d_model)])

    # fused QKV projection -> (3, B*S, d_model), heads packed in the last dim
    qkv = fused_linear(x, w_qkv, b_qkv, out_dtype=jnp.bfloat16)
    qkv = qkv.reshape(3, B, S, d_model)               # free (row-major) reshape

    ctx = flash_attention(qkv, h)                     # (B, S, d_model), heads concat

    # final projection; keep f32 output to match the module's return dtype
    # (use out_dtype=bf16 here if the consumer accepts it -> halves writeback).
    out = fused_linear(ctx.reshape(1, B * S, d_model), w_o, b_o,
                       out_dtype=jnp.float32)
    return out.reshape(B, S, d_model)


# --------------------------------- reference --------------------------------

def reference_mha(params, query, key, value, h):
    B, S, d_model = query.shape
    d_k = d_model // h

    def proj(x, wb):
        w, b = wb
        y = x.reshape(B * S, d_model) @ w + b
        return y.reshape(B, S, h, d_k).transpose(0, 2, 1, 3)

    q = proj(query, params[0])
    k = proj(key, params[1])
    v = proj(value, params[2])
    scores = jnp.einsum("bhqd,bhkd->bhqk", q, k) / math.sqrt(d_k)
    attn = jax.nn.softmax(scores, axis=-1)
    ctx = jnp.einsum("bhqk,bhkd->bhqd", attn, v)
    ctx = ctx.transpose(0, 2, 1, 3).reshape(B * S, d_model)
    w_o, b_o = params[3]
    return (ctx @ w_o + b_o).reshape(B, S, d_model)


# ----------------------------------- main ------------------------------------

if __name__ == "__main__":
    B, S, d_model, h = 2, 8, 32, 4

    root = jax.random.PRNGKey(0)
    k_param, k_q, k_k, k_v = jax.random.split(root, 4)

    params = init_mha_params(k_param, h, d_model)
    prepared = prepare_mha_params(params, h)
    query = jax.random.normal(k_q, (B, S, d_model), jnp.float32)
    key_ = jax.random.normal(k_k, (B, S, d_model), jnp.float32)
    value = jax.random.normal(k_v, (B, S, d_model), jnp.float32)

    # bf16 MXU matmuls (f32 accumulation) => loosened tolerance vs f32 reference.
    ATOL = RTOL = 2e-2

    # Path 1: self-attention (shared-x fused QKV projection).
    out_self = multi_headed_attention(prepared, query, query, query, h)
    out_self = jax.block_until_ready(out_self)
    ref_self = reference_mha(params, query, query, query, h)
    assert out_self.shape == (B, S, d_model)
    assert jnp.allclose(out_self, ref_self, atol=ATOL, rtol=RTOL), "self-attn mismatch"

    # Path 2: distinct q/k/v inputs (stacked-activation fused projection).
    out_x = multi_headed_attention(prepared, query, key_, value, h)
    out_x = jax.block_until_ready(out_x)
    ref_x = reference_mha(params, query, key_, value, h)
    assert jnp.allclose(out_x, ref_x, atol=ATOL, rtol=RTOL), "cross-attn mismatch"

    print("KERNEL_OK")
</pallas_src>

<mosaic_0001>
module attributes {stable_mosaic.version = 11 : i64} {
  func.func @_linear_kernel(%arg0: i32, %arg1: i32, %arg2: memref<1x16x32xbf16, #tpu.memory_space<vmem>>, %arg3: memref<1x32x32xbf16, #tpu.memory_space<vmem>>, %arg4: memref<1x1x32xf32, #tpu.memory_space<vmem>>, %arg5: memref<1x16x32xbf16, #tpu.memory_space<vmem>>) attributes {dimension_semantics = [#tpu.dimension_semantics<arbitrary>, #tpu.dimension_semantics<parallel>], iteration_bounds = array<i64: 3, 1>, scalar_prefetch = 0 : i64, scratch_operands = 0 : i64, tpu.core_type = #tpu.core_type<tc>, window_params = [{transform_indices = @transform_0, window_bounds = array<i64: 1, 16, 32>}, {transform_indices = @transform_1, window_bounds = array<i64: 1, 32, 32>}, {transform_indices = @transform_2, window_bounds = array<i64: 1, 1, 32>}, {transform_indices = @transform_3, window_bounds = array<i64: 1, 16, 32>}]} {
    %c0 = arith.constant 0 : index
    %c0_0 = arith.constant 0 : index
    %c0_1 = arith.constant 0 : index
    %0 = vector.load %arg2[%c0, %c0_0, %c0_1] : memref<1x16x32xbf16, #tpu.memory_space<vmem>>, vector<1x16x32xbf16>
    %1 = vector.shape_cast %0 : vector<1x16x32xbf16> to vector<16x32xbf16>
    %c0_2 = arith.constant 0 : index
    %c0_3 = arith.constant 0 : index
    %c0_4 = arith.constant 0 : index
    %2 = vector.load %arg3[%c0_2, %c0_3, %c0_4] : memref<1x32x32xbf16, #tpu.memory_space<vmem>>, vector<1x32x32xbf16>
    %3 = vector.shape_cast %2 : vector<1x32x32xbf16> to vector<32x32xbf16>
    %cst = arith.constant dense<0.000000e+00> : vector<16x32xf32>
    %4 = tpu.matmul %1, %3, %cst {dimension_numbers = #tpu.dot_dimension_numbers<[1], [0], [0], [1], [0, 0, 1, 1], [], []>} : vector<16x32xbf16>, vector<32x32xbf16>, vector<16x32xf32> -> vector<16x32xf32>
    %c0_5 = arith.constant 0 : index
    %c0_6 = arith.constant 0 : index
    %c0_7 = arith.constant 0 : index
    %5 = vector.load %arg4[%c0_5, %c0_6, %c0_7] : memref<1x1x32xf32, #tpu.memory_space<vmem>>, vector<1x1x32xf32>
    %6 = vector.shape_cast %5 : vector<1x1x32xf32> to vector<1x32xf32>
    %7 = vector.broadcast %6 : vector<1x32xf32> to vector<16x32xf32>
    %8 = arith.addf %4, %7 : vector<16x32xf32>
    %9 = arith.truncf %8 : vector<16x32xf32> to vector<16x32xbf16>
    %c0_8 = arith.constant 0 : index
    %c0_9 = arith.constant 0 : index
    %c0_10 = arith.constant 0 : index
    %10 = vector.load %arg5[%c0_8, %c0_9, %c0_10] : memref<1x16x32xbf16, #tpu.memory_space<vmem>>, vector<1x16x32xbf16>
    %11 = vector.shape_cast %10 : vector<1x16x32xbf16> to vector<16x32xbf16>
    %12 = vector.shape_cast %9 : vector<16x32xbf16> to vector<1x16x32xbf16>
    tpu.vector_store %arg5[%c0_8, %c0_9, %c0_10], %12 {strides = array<i32>} : memref<1x16x32xbf16, #tpu.memory_space<vmem>>, vector<1x16x32xbf16>,
    return
  }
  func.func @transform_0(%arg0: i32, %arg1: i32) -> (i32, i32, i32) {
    %c0_i32 = arith.constant 0 : i32
    %c0_i32_0 = arith.constant 0 : i32
    %c0_i32_1 = arith.constant 0 : i32
    return %c0_i32, %arg1, %c0_i32_0 : i32, i32, i32
  }
  func.func @transform_1(%arg0: i32, %arg1: i32) -> (i32, i32, i32) {
    %c0_i32 = arith.constant 0 : i32
    %c0_i32_0 = arith.constant 0 : i32
    %c0_i32_1 = arith.constant 0 : i32
    return %arg0, %c0_i32, %c0_i32_0 : i32, i32, i32
  }
  func.func @transform_2(%arg0: i32, %arg1: i32) -> (i32, i32, i32) {
    %c0_i32 = arith.constant 0 : i32
    %c0_i32_0 = arith.constant 0 : i32
    %c0_i32_1 = arith.constant 0 : i32
    return %arg0, %c0_i32, %c0_i32_0 : i32, i32, i32
  }
  func.func @transform_3(%arg0: i32, %arg1: i32) -> (i32, i32, i32) {
    %c0_i32 = arith.constant 0 : i32
    %c0_i32_0 = arith.constant 0 : i32
    return %arg0, %arg1, %c0_i32 : i32, i32, i32
  }
}

</mosaic_0001>

<llo_original>
// kernel: tpu_custom_call.1
$region0: #{tpu_custom_call.1}
  #allocation0 [shape = 'u32[]', space=smem, size = 0x4, offset = 0x4, fixed_abs, tag = 'smem constant byte address 0x4 - core index']
  #allocation1 [shape = 'u32[144,128]{1,0:T(1,128)}', space=vmem, size = 0x12000, scoped, tag = 'internal scratch']
  %s0 = inlined_call_operand.hbm [shape: bf16[1,16,32], index: 0, kind: input, shape index: {}]
  %s1 = inlined_call_operand.hbm [shape: bf16[3,32,32], index: 1, kind: input, shape index: {}]
  %s2 = inlined_call_operand.vmem [shape: f32[3,1,32], index: 2, kind: input, shape index: {}]
  %s3 = inlined_call_operand.hbm [shape: bf16[3,16,32], index: 3, kind: output, shape index: {}]
  %s4 = sld [smem:[#allocation0]]
  $region53: #{tpu_custom_call.1} parent=0
    _
  %s6 = ssub.s32 1, %s4
  %s7 = scalar_select 0, %s6, %s4
  $region1: #{tpu_custom_call.1} parent=0
    #allocation2 [shape = 'u8[4096]{0}', space=vmem, size = 0x1000, scoped, tag = 'input window, operand 0, single buffered']
    #allocation3 [shape = 's32[2]{0}', space=sflag, size = 0x8, scoped, tag = 'scoped memory for tpu_custom_call.1']
    #allocation4 [shape = 's32[2]{0}', space=sflag, size = 0x8, scoped, tag = 'scoped memory for tpu_custom_call.1']
    #allocation5 [shape = 'u8[16384]{0}', space=vmem, size = 0x4000, scoped, tag = 'input window, operand 1']
    #allocation6 [shape = 's32[2]{0}', space=sflag, size = 0x8, scoped, tag = 'scoped memory for tpu_custom_call.1']
    #allocation7 [shape = 'u8[8192]{0}', space=vmem, size = 0x2000, scoped, tag = 'output window, operand 0']
    %8 = vsyncpa [#allocation3], 0
    %9 = vsyncpa [#allocation6], 0
    %s10 = scalar_lea.sflag [#allocation6], 1
    %11 = vsyncpa %s10, 0
    %12 = vsyncpa [#allocation4], 0
    %s13 = scalar_lea.sflag [#allocation4], 1
    %14 = vsyncpa %s13, 0
    loop: start=0, step=1, limit=5
    $region2: #{tpu_custom_call.1} parent=1 // loop_pre_header
      _
    $region3: #{tpu_custom_call.1} parent=1 // loop_header
      %s16 = sphi 0, %s20
      %p17 = scmp.ge.s32.totalorder %s16, 5
      %s23 = sphi 0, %s35
      %s24 = sphi 0, %s31
      %s25 = sphi 0, %s23
      %s26 = sphi 0, %s24
      %s27 = sphi 0, %s25
      %s28 = sphi 0, %s26
      %s38 = sphi 0, %s40
      %s41 = sphi 0, %s38
      %s42 = sphi 0, %s41
      %s58 = sphi 0, %s42
      %s64 = sphi 0, %s66
      %s67 = sphi 0, %s64
      %s68 = sphi 0, %s67
      %s84 = sphi 0, %s68
      %s90 = sphi 0, %s92
      %s93 = sphi 0, %s90
      %s94 = sphi 0, %s93
      %s110 = sphi 0, %s94
      %s118 = sphi 0, %s120
      %s121 = sphi 0, %s118
      %s122 = sphi 0, %s121
      %s138 = sphi 0, %s122
    $region4: #{tpu_custom_call.1} parent=1 // loop_header_branch
      %19 = sbr.rel (%p17) target = $region8
    $region5: #{tpu_custom_call.1} parent=1 // loop_body
      %s21 = ssub.s32 %s16, 1
      %s22 = ssub.s32 %s16, 2
      %s29 = sadd.s32 1, %s24
      %p30 = scmp.ge.s32.totalorder %s29, 1
      %s31 = scalar_select %p30, 0, %s29
      %s32 = sadd.s32 1, %s23
      %s33 = scalar_select %p30, %s32, %s23
      %p34 = scmp.ge.s32.totalorder %s33, 3
      %s35 = scalar_select %p34, 0, %s33
      %s36 = ssub.s32 %s24, %s31
      %p37 = scmp.eq.s32.totalorder %s36, 0
      %s39 = sadd.s32 %s38, 1
      %s40 = scalar_select %p37, %s38, %s39
      %p43 = pneg %p37
      %p44 = scmp.eq.s32.totalorder %s16, 2
      %p45 = por %p43, %p44
      %p46 = scmp.ne.s32.totalorder %s38, %s41
      %p47 = scmp.eq.s32.totalorder %s16, 0
      %p48 = por %p46, %p47
      %p49 = scmp.ne.s32.totalorder %s38, %s41
      %p50 = scmp.eq.s32.totalorder %s21, 2
      %p51 = por %p49, %p50
      %p52 = scmp.ne.s32.totalorder %s41, %s42
      %p53 = scmp.eq.s32.totalorder %s21, 0
      %p54 = por %p52, %p53
      %p55 = scmp.ne.s32.totalorder %s41, %s42
      %p56 = scmp.eq.s32.totalorder %s22, 2
      %p57 = por %p55, %p56
      %p59 = scmp.ne.s32.totalorder %s42, %s58
      %p60 = scmp.eq.s32.totalorder %s22, 0
      %p61 = por %p59, %p60
      %s62 = ssub.s32 %s23, %s35
      %p63 = scmp.eq.s32.totalorder %s62, 0
      %s65 = sadd.s32 %s64, 1
      %s66 = scalar_select %p63, %s64, %s65
      %p69 = pneg %p63
      %p70 = scmp.eq.s32.totalorder %s16, 2
      %p71 = por %p69, %p70
      %p72 = scmp.ne.s32.totalorder %s64, %s67
      %p73 = scmp.eq.s32.totalorder %s16, 0
      %p74 = por %p72, %p73
      %p75 = scmp.ne.s32.totalorder %s64, %s67
      %p76 = scmp.eq.s32.totalorder %s21, 2
      %p77 = por %p75, %p76
      %p78 = scmp.ne.s32.totalorder %s67, %s68
      %p79 = scmp.eq.s32.totalorder %s21, 0
      %p80 = por %p78, %p79
      %p81 = scmp.ne.s32.totalorder %s67, %s68
      %p82 = scmp.eq.s32.totalorder %s22, 2
      %p83 = por %p81, %p82
      %p85 = scmp.ne.s32.totalorder %s68, %s84
      %p86 = scmp.eq.s32.totalorder %s22, 0
      %p87 = por %p85, %p86
      %s88 = ssub.s32 %s23, %s35
      %p89 = scmp.eq.s32.totalorder %s88, 0
      %s91 = sadd.s32 %s90, 1
      %s92 = scalar_select %p89, %s90, %s91
      %p95 = pneg %p89
      %p96 = scmp.eq.s32.totalorder %s16, 2
      %p97 = por %p95, %p96
      %p98 = scmp.ne.s32.totalorder %s90, %s93
      %p99 = scmp.eq.s32.totalorder %s16, 0
      %p100 = por %p98, %p99
      %p101 = scmp.ne.s32.totalorder %s90, %s93
      %p102 = scmp.eq.s32.totalorder %s21, 2
      %p103 = por %p101, %p102
      %p104 = scmp.ne.s32.totalorder %s93, %s94
      %p105 = scmp.eq.s32.totalorder %s21, 0
      %p106 = por %p104, %p105
      %p107 = scmp.ne.s32.totalorder %s93, %s94
      %p108 = scmp.eq.s32.totalorder %s22, 2
      %p109 = por %p107, %p108
      %p111 = scmp.ne.s32.totalorder %s94, %s110
      %p112 = scmp.eq.s32.totalorder %s22, 0
      %p113 = por %p111, %p112
      %s114 = ssub.s32 %s23, %s35
      %s115 = ssub.s32 %s24, %s31
      %s116 = sor.u32 %s114, %s115
      %p117 = scmp.eq.s32.totalorder %s116, 0
      %s119 = sadd.s32 %s118, 1
      %s120 = scalar_select %p117, %s118, %s119
      %p123 = pneg %p117
      %p124 = scmp.eq.s32.totalorder %s16, 2
      %p125 = por %p123, %p124
      %p126 = scmp.ne.s32.totalorder %s118, %s121
      %p127 = scmp.eq.s32.totalorder %s16, 0
      %p128 = por %p126, %p127
      %p129 = scmp.ne.s32.totalorder %s118, %s121
      %p130 = scmp.eq.s32.totalorder %s21, 2
      %p131 = por %p129, %p130
      %p132 = scmp.ne.s32.totalorder %s121, %s122
      %p133 = scmp.eq.s32.totalorder %s21, 0
      %p134 = por %p132, %p133
      %p135 = scmp.ne.s32.totalorder %s121, %s122
      %p136 = scmp.eq.s32.totalorder %s22, 2
      %p137 = por %p135, %p136
      %p139 = scmp.ne.s32.totalorder %s122, %s138
      %p140 = scmp.eq.s32.totalorder %s22, 0
      %p141 = por %p139, %p140
      %p142 = scmp.le.s32.totalorder 1, %s16
      %p143 = scmp.lt.s32.totalorder %s16, 4
      %p144 = pnand %p142, %p143
      %p145 = pneg %p144
      // Predicated region
      $region9: #{tpu_custom_call.1} parent=5 // pred_check
        _
      $region10: #{tpu_custom_call.1} parent=5 // pred_check_branch
        %147 = sbr.rel (%p144) target = $region12
      $region11: #{tpu_custom_call.1} parent=5 // pred_region
        %s148 = ssub.s32 %s16, 1
        // Predicated region
        $region13: #{tpu_custom_call.1} parent=11 // pred_check
          %p149 = pneg %p54
        $region14: #{tpu_custom_call.1} parent=11 // pred_check_branch
          %151 = sbr.rel (%p149) target = $region16
        $region15: #{tpu_custom_call.1} parent=11 // pred_region
          %s152 = smul.u32 2, %s26
          %s154 = ssub.s32 128, 128
          %155 = vsyncadd [#allocation3], %s154
          %s156 = smul.addr %s152, 64
          %s157 = scalar_lea.hbm %s0, %s156
          %s158 = sshll.u32 [#allocation2], 4
          %s159 = int_to_ptr.vmem [resolvable:$true] %s158
          %164 = dma.hbm_to_vmem [thread:$0]  %s157, 128, %s159, [#allocation3], 64, 64, 4
        $region16: #{tpu_custom_call.1} parent=11 // pred_fallthru
          _
      $region12: #{tpu_custom_call.1} parent=5 // pred_fallthru
        _
      %p165 = scmp.lt.s32.totalorder %s16, 3
      // Predicated region
      $region17: #{tpu_custom_call.1} parent=5 // pred_check
        %p166 = pneg %p165
      $region18: #{tpu_custom_call.1} parent=5 // pred_check_branch
        %168 = sbr.rel (%p166) target = $region20
      $region19: #{tpu_custom_call.1} parent=5 // pred_region
        // Predicated region
        $region21: #{tpu_custom_call.1} parent=19 // pred_check
          %p169 = pneg %p74
        $region22: #{tpu_custom_call.1} parent=19 // pred_check_branch
          %171 = sbr.rel (%p169) target = $region24
        $region23: #{tpu_custom_call.1} parent=19 // pred_region
          %s172 = sand.u32 %s64, 1
          %s173 = scalar_lea.sflag [#allocation6], %s172
          %s174 = sand.u32 %s64, 1
          %s175 = smul.addr %s174, 16
          %s176 = scalar_lea.vmem [#allocation5], %s175
          %s178 = ssub.s32 256, 256
          %179 = vsyncadd %s173, %s178
          %s180 = smul.addr %s23, 4
          %s181 = smul.addr %s180, 64
          %s182 = scalar_lea.hbm %s1, %s181
          %s183 = sshll.u32 %s176, 4
          %s184 = int_to_ptr.vmem [resolvable:$true] %s183
          %189 = dma.hbm_to_vmem [thread:$0]  %s182, 256, %s184, %s173, 64, 64, 4
        $region24: #{tpu_custom_call.1} parent=19 // pred_fallthru
          _
        // Predicated region
        $region25: #{tpu_custom_call.1} parent=19 // pred_check
          %p190 = pneg %p100
        $region26: #{tpu_custom_call.1} parent=19 // pred_check_branch
          %192 = sbr.rel (%p190) target = $region28
        $region27: #{tpu_custom_call.1} parent=19 // pred_region
          %p193 = scmp.lt.s32.totalorder %s23, 2
          %s194 = scalar_select %p193, %s23, 2
          %s195 = scalar_lea.vmem %s2, %s194
        $region28: #{tpu_custom_call.1} parent=19 // pred_fallthru
          _
      $region20: #{tpu_custom_call.1} parent=5 // pred_fallthru
        _
      %p196 = scmp.le.s32.totalorder 1, %s16
      %p197 = scmp.lt.s32.totalorder %s16, 4
      %p198 = pnand %p196, %p197
      %p199 = pneg %p198
      // Predicated region
      $region29: #{tpu_custom_call.1} parent=5 // pred_check
        _
      $region30: #{tpu_custom_call.1} parent=5 // pred_check_branch
        %201 = sbr.rel (%p198) target = $region32
      $region31: #{tpu_custom_call.1} parent=5 // pred_region
        %s202 = ssub.s32 %s16, 1
        // Predicated region
        $region33: #{tpu_custom_call.1} parent=31 // pred_check
          %p203 = pneg %p54
        $region34: #{tpu_custom_call.1} parent=31 // pred_check_branch
          %205 = sbr.rel (%p203) target = $region36
        $region35: #{tpu_custom_call.1} parent=31 // pred_region
          %206 = dma.done [#allocation3], 128
        $region36: #{tpu_custom_call.1} parent=31 // pred_fallthru
          _
        %s207 = sand.u32 %s67, 1
        %s208 = scalar_lea.sflag [#allocation6], %s207
        %s209 = sand.u32 %s67, 1
        %s210 = smul.addr %s209, 16
        %s211 = scalar_lea.vmem [#allocation5], %s210
        // Predicated region
        $region37: #{tpu_custom_call.1} parent=31 // pred_check
          %p212 = pneg %p80
        $region38: #{tpu_custom_call.1} parent=31 // pred_check_branch
          %214 = sbr.rel (%p212) target = $region40
        $region39: #{tpu_custom_call.1} parent=31 // pred_region
          %215 = dma.done %s208, 256
        $region40: #{tpu_custom_call.1} parent=31 // pred_fallthru
          _
        %p216 = pneg %p54
        %p217 = pneg %p51
        %s218 = sand.u32 %s67, 1
        %s219 = scalar_lea.sflag [#allocation6], %s218
        %s220 = sand.u32 %s67, 1
        %s221 = smul.addr %s220, 16
        %s222 = scalar_lea.vmem [#allocation5], %s221
        %p223 = pneg %p80
        %p224 = pneg %p77
        %p225 = scmp.lt.s32.totalorder %s25, 2
        %s226 = scalar_select %p225, %s25, 2
        %s227 = scalar_lea.vmem %s2, %s226
        %p228 = pneg %p106
        %p229 = pneg %p103
        %p230 = pneg %p134
        %p231 = pneg %p131
        %s232 = sand.u32 %s121, 1
        %s233 = scalar_lea.sflag [#allocation4], %s232
        %s234 = sand.u32 %s121, 1
        %s235 = smul.addr %s234, 8
        %s236 = scalar_lea.vmem [#allocation7], %s235
        %s237 = smul.u32 2, %s26
        %p238 = scmp.lt.s32.totalorder %s25, 2
        %s239 = scalar_select %p238, %s25, 2
        %s240 = scalar_lea.vmem %s2, %s239
        %s241 = smul.u32 2, %s26
        %v243 = vld [vmem:[#allocation2] sm:$0xf]
        %v244 = vld [vmem:[#allocation2 + $0x4] sm:$0xf]
        %v245 = vld [vmem:[%s211] sm:$0xf]
        %v246 = vld [vmem:[%s211 + $0x4] sm:$0xf]
        %v247 = vld [vmem:[%s211 + $0x8] sm:$0xf]
        %v248 = vld [vmem:[%s211 + $0xc] sm:$0xf]
        %v249 = vld [vmem:[%s240] sm:$0x1]
        %v251 = vlaneseq
        %v252 = vshrl.u32 %v251, 7
        %v253 = vsub.s32 0, %v252
        %v254 = vrot.slane %v249, %v253
        %v258 = vunpack.c.l.b16 %v243
        %v259 = vunpack.c.l.b16 %v244
        %v260 = vpack.c.b16 %v259, %v258
        %v265 = vunpack.c.l.b16 %v245
        %v266 = vunpack.c.l.b16 %v246
        %v267 = vunpack.c.l.b16 %v247
        %v268 = vunpack.c.l.b16 %v248
        %v269 = vpack.c.b16 %v266, %v265
        %v270 = vpack.c.b16 %v268, %v267
        %vm273 = vcmask 261120
        %v275 = vsel %vm273, %v260, 0
        %277 = vmatprep.subr.bf16.mxu0 0
        %278 = vmatpush1.bf16.msra.mxu0 0
        %279 = vmatprep.subr.bf16.mxu0 0
        %280 = vmatpush1.bf16.msra.mxu0 0
        %281 = vmatprep.subr.bf16.mxu0 0
        %282 = vmatpush1.bf16.msra.mxu0 0
        %283 = vmatprep.subr.bf16.mxu0 0
        %284 = vmatpush1.bf16.msra.mxu0 0
        %285 = vmatprep.subr.bf16.mxu0 0
        %286 = vmatpush1.bf16.msra.mxu0 0
        %287 = vmatprep.subr.bf16.mxu0 0
        %288 = vmatpush1.bf16.msra.mxu0 0
        %289 = vmatprep.subr.bf16.mxu0 0
        %290 = vmatpush1.bf16.msra.mxu0 %v270
        %291 = vmatprep.subr.bf16.mxu0 0
        %292 = vmatpush1.bf16.msra.mxu0 %v269
        %293 = vmatprep.subr.bf16.mxu0 0
        %294 = vmatpush2.bf16.msra.mxu0 0
        %295 = vmatprep.subr.bf16.mxu0 0
        %296 = vmatpush2.bf16.msra.mxu0 0
        %297 = vmatprep.subr.bf16.mxu0 0
        %298 = vmatpush2.bf16.msra.mxu0 0
        %299 = vmatprep.subr.bf16.mxu0 0
        %300 = vmatpush2.bf16.msra.mxu0 0
        %301 = vmatprep.subr.bf16.mxu0 0
        %302 = vmatpush2.bf16.msra.mxu0 0
        %303 = vmatprep.subr.bf16.mxu0 0
        %304 = vmatpush2.bf16.msra.mxu0 0
        %305 = vmatprep.subr.bf16.mxu0 0
        %306 = vmatpush2.bf16.msra.mxu0 0
        %307 = vmatprep.subr.bf16.mxu0 0
        %308 = vmatpush2.bf16.msra.mxu0 0
        %309 = vmatprep.mubr.bf16.mxu0 0
        %310 = vmatmul.mubr.bf16.gmra.mxu0 %v275
        %v311 = vpop.f32.mrf.mxu0
        %v312 = vadd.f32 %v254, %v311
        %v313 = vpop.f32.mrf.mxu0
        %v314 = vpop.f32.mrf.mxu0
        %v315 = vadd.f32 %v254, %v314
        %v316 = vpop.f32.mrf.mxu0
        %317 = vdwg.mxu0
        %v318 = vpack.c.bf16 %v315, %v312
        %v320 = vunpack.c.l.b16 %v318
        %v321 = vunpack.c.h.b16 %v318
        %v322 = vpack.c.b16 %v320, %v320
        %v323 = vpack.c.b16 %v321, %v321
        %vm326 = vcmask 257024
        %327 = vst.msk [vmem:[%s236] sm:$0xf] %vm326, %v322
        %328 = vst.msk [vmem:[%s236 + $0x4] sm:$0xf] %vm326, %v323
        %s329 = sand.u32 %s121, 1
        %s330 = scalar_lea.sflag [#allocation4], %s329
        %s331 = sand.u32 %s121, 1
        %s332 = smul.addr %s331, 8
        %s333 = scalar_lea.vmem [#allocation7], %s332
        // Predicated region
        $region41: #{tpu_custom_call.1} parent=31 // pred_check
          %p334 = pneg %p131
        $region42: #{tpu_custom_call.1} parent=31 // pred_check_branch
          %336 = sbr.rel (%p334) target = $region44
        $region43: #{tpu_custom_call.1} parent=31 // pred_region
          %s337 = smul.u32 2, %s26
          %s339 = ssub.s32 128, 128
          %340 = vsyncadd %s330, %s339
          %s341 = smul.addr %s25, 2
          %s342 = sadd.s32 %s337, %s341
          %s343 = smul.addr %s342, 64
          %s344 = scalar_lea.hbm %s3, %s343
          %s345 = sshll.u32 %s333, 4
          %s346 = int_to_ptr.vmem [resolvable:$true] %s345
          %351 = dma.vmem_to_hbm [thread:$0]  %s346, 128, %s344, %s330, 64, 64, 4
        $region44: #{tpu_custom_call.1} parent=31 // pred_fallthru
          _
      $region32: #{tpu_custom_call.1} parent=5 // pred_fallthru
        _
      %p352 = scmp.le.s32.totalorder 2, %s16
      // Predicated region
      $region45: #{tpu_custom_call.1} parent=5 // pred_check
        %p353 = pneg %p352
      $region46: #{tpu_custom_call.1} parent=5 // pred_check_branch
        %355 = sbr.rel (%p353) target = $region48
      $region47: #{tpu_custom_call.1} parent=5 // pred_region
        %s356 = ssub.s32 %s16, 2
        // Predicated region
        $region49: #{tpu_custom_call.1} parent=47 // pred_check
          %p357 = pneg %p137
        $region50: #{tpu_custom_call.1} parent=47 // pred_check_branch
          %359 = sbr.rel (%p357) target = $region52
        $region51: #{tpu_custom_call.1} parent=47 // pred_region
          %s360 = sand.u32 %s122, 1
          %s361 = scalar_lea.sflag [#allocation4], %s360
          %s362 = sand.u32 %s122, 1
          %s363 = smul.addr %s362, 8
          %s364 = scalar_lea.vmem [#allocation7], %s363
          %365 = dma.done %s361, 128
        $region52: #{tpu_custom_call.1} parent=47 // pred_fallthru
          _
      $region48: #{tpu_custom_call.1} parent=5 // pred_fallthru
        _
    $region6: #{tpu_custom_call.1} parent=1 // loop_footer
      %s20 = sadd.s32 1, %s16
    $region7: #{tpu_custom_call.1} parent=1 // loop_footer_branch
      %15 = sbr.rel target = $region3
    $region8: #{tpu_custom_call.1} parent=1 // loop_exit
      _
    %366 = vsyncpa [#allocation3], 1
    %s367 = scalar_lea.sflag [#allocation3], 1
    %368 = vsyncpa %s367, 1
    %369 = vsyncpa [#allocation6], 1
    %s370 = scalar_lea.sflag [#allocation6], 1
    %371 = vsyncpa %s370, 1
    %372 = vsyncpa [#allocation4], 1
    %s373 = scalar_lea.sflag [#allocation4], 1
    %374 = vsyncpa %s373, 1

</llo_original>
